<compile_context>
chip_gen: v6e
topology: v6e:2x2x1
jax: 0.10.0
libtpu: 0.0.40
codegen_flags: <defaults>
</compile_context>

<pallas_src>
import functools

import jax
import jax.numpy as jnp
from jax.experimental import pallas as pl
from jax.experimental.pallas import tpu as pltpu


def _combiner_kernel(x_ref, w_ref, o_ref):
    # x_ref: (b_n, K, t_hw); w_ref: (Cout, K); o_ref: (b_n, Cout, t_hw)
    # One fused K = 3*nj matmul per batch image in the block, f32 accumulate.
    w = w_ref[...]
    for b in range(o_ref.shape[0]):  # small static unroll over the batch block
        o_ref[b] = jnp.dot(
            w, x_ref[b], preferred_element_type=jnp.float32
        ).astype(o_ref.dtype)


def _round_up(x, m):
    return ((x + m - 1) // m) * m


def _pick_t_hw(HW, cap):
    """Largest multiple of 128 that divides HW and is <= cap; HW if none exists."""
    if HW % 128 != 0:
        # Irregular / tiny spatial size: take the whole row (block dim == full
        # array dim is always legal); no masked stores either way.
        return HW
    best = 128
    d = 256
    limit = min(HW, cap)
    while d <= limit:
        if HW % d == 0:
            best = d
        d += 128
    return best


@functools.partial(jax.jit, static_argnames=("t_hw_cap",))
def heatmap_combiner(xy_hm, zy_hm, xz_hm, weight, *, t_hw_cap=8192):
    """xy_hm/zy_hm/xz_hm: (N, nj, H, W); weight: (Cout, 3*nj).  Returns (N, Cout, H, W)."""
    N, nj, H, W = xy_hm.shape
    Cout, K = weight.shape
    assert K == 3 * nj
    HW = H * W

    # Channel concat (matches torch.cat([xy, zy, xz], -3) order) + free reshape.
    x = jnp.concatenate([xy_hm, zy_hm, xz_hm], axis=1).reshape(N, K, HW)

    # --- tile selection ------------------------------------------------------
    t_hw = _pick_t_hw(HW, max(128, (t_hw_cap // 128) * 128))

    # Block several batch images per grid step when the pixel tile is small,
    # to amortize the ~0.35 us/step grid overhead.
    b_n = int(min(N, max(1, 2048 // t_hw)))

    # Keep >= 2 grid steps so v7x's two TensorCores both get work; the extra
    # step is negligible (~0.35 us) on single-TC v5e/v6e.
    def _steps(b, t):
        return pl.cdiv(N, b) * pl.cdiv(HW, t)

    while _steps(b_n, t_hw) < 2:
        if b_n > 1:
            b_n = pl.cdiv(b_n, 2)
        elif t_hw % 256 == 0:
            t_hw //= 2
        else:
            break

    grid = (pl.cdiv(N, b_n), pl.cdiv(HW, t_hw))

    x_spec = pl.BlockSpec((b_n, K, t_hw), lambda n, i: (n, 0, i))
    w_spec = pl.BlockSpec((Cout, K), lambda n, i: (0, 0))
    o_spec = pl.BlockSpec((b_n, Cout, t_hw), lambda n, i: (n, 0, i))

    # --- VMEM budget (double-buffered working set + headroom) -----------------
    itemsize = jnp.dtype(x.dtype).itemsize
    w_itemsize = jnp.dtype(weight.dtype).itemsize
    x_buf = b_n * _round_up(K, 8) * t_hw * itemsize
    o_buf = b_n * _round_up(Cout, 8) * t_hw * itemsize
    w_buf = _round_up(Cout, 8) * _round_up(K, 128) * w_itemsize
    vmem_limit = int(min(max(2 * (x_buf + o_buf + w_buf) + (2 << 20), 4 << 20),
                         100 << 20))

    cost = pl.CostEstimate(
        flops=2 * N * HW * K * Cout,
        transcendentals=0,
        bytes_accessed=(N * K * HW + N * Cout * HW) * itemsize
        + Cout * K * w_itemsize,
    )

    out = pl.pallas_call(
        _combiner_kernel,
        out_shape=jax.ShapeDtypeStruct((N, Cout, HW), xy_hm.dtype),
        grid_spec=pltpu.PrefetchScalarGridSpec(
            num_scalar_prefetch=0,
            grid=grid,
            in_specs=[x_spec, w_spec],
            out_specs=o_spec,
        ),
        compiler_params=pltpu.CompilerParams(
            dimension_semantics=("parallel", "parallel"),
            vmem_limit_bytes=vmem_limit,
        ),
        cost_estimate=cost,
    )(x, weight)

    return out.reshape(N, Cout, H, W)


def reference(xy_hm, zy_hm, xz_hm, weight):
    x = jnp.concatenate([xy_hm, zy_hm, xz_hm], axis=-3)  # (N, 3*nj, H, W)
    return jnp.einsum("nchw,oc->nohw", x, weight)


if __name__ == "__main__":
    key = jax.random.PRNGKey(0)
    N, n_joints, H, W = 2, 4, 16, 16
    Cout = 128

    k1, k2, k3, kw = jax.random.split(key, 4)
    xy_hm = jax.random.normal(k1, (N, n_joints, H, W), dtype=jnp.float32)
    zy_hm = jax.random.normal(k2, (N, n_joints, H, W), dtype=jnp.float32)
    xz_hm = jax.random.normal(k3, (N, n_joints, H, W), dtype=jnp.float32)

    # Deterministic synthetic weight for Conv2d(3*n_joints, 128, 1, bias=False).
    # TODO(synk): margipose's init_parameters uses its own init scheme; a scaled
    # normal is used here (only shapes/semantics matter for the kernel).
    fan_in = 3 * n_joints
    weight = jax.random.normal(kw, (Cout, 3 * n_joints), dtype=jnp.float32) / jnp.sqrt(fan_in)

    out = heatmap_combiner(xy_hm, zy_hm, xz_hm, weight)
    out = jax.block_until_ready(out)

    ref = reference(xy_hm, zy_hm, xz_hm, weight)
    assert out.shape == (N, Cout, H, W), out.shape
    assert jnp.allclose(out, ref, atol=1e-4, rtol=1e-4), float(jnp.max(jnp.abs(out - ref)))

    print("KERNEL_OK")
</pallas_src>

<mosaic_0001>
module attributes {stable_mosaic.version = 11 : i64} {
  func.func @_combiner_kernel(%arg0: i32, %arg1: i32, %arg2: memref<1x12x256xf32, #tpu.memory_space<vmem>>, %arg3: memref<128x12xf32, #tpu.memory_space<vmem>>, %arg4: memref<1x128x256xf32, #tpu.memory_space<vmem>>) attributes {dimension_semantics = [#tpu.dimension_semantics<parallel>, #tpu.dimension_semantics<parallel>], iteration_bounds = array<i64: 2, 1>, scalar_prefetch = 0 : i64, scratch_operands = 0 : i64, tpu.core_type = #tpu.core_type<tc>, window_params = [{transform_indices = @transform_0, window_bounds = array<i64: 1, 12, 256>}, {pipeline_mode = #tpu.pipeline_mode<synchronous>, transform_indices = @transform_1, window_bounds = array<i64: 128, 12>}, {transform_indices = @transform_2, window_bounds = array<i64: 1, 128, 256>}]} {
    %c0 = arith.constant 0 : index
    %c0_0 = arith.constant 0 : index
    %0 = vector.load %arg3[%c0, %c0_0] : memref<128x12xf32, #tpu.memory_space<vmem>>, vector<128x12xf32>
    %c0_1 = arith.constant 0 : index
    %c0_2 = arith.constant 0 : index
    %c0_3 = arith.constant 0 : index
    %1 = vector.load %arg2[%c0_1, %c0_2, %c0_3] : memref<1x12x256xf32, #tpu.memory_space<vmem>>, vector<1x12x256xf32>
    %2 = vector.shape_cast %1 : vector<1x12x256xf32> to vector<12x256xf32>
    %cst = arith.constant dense<0.000000e+00> : vector<128x256xf32>
    %3 = tpu.matmul %0, %2, %cst {dimension_numbers = #tpu.dot_dimension_numbers<[1], [0], [0], [1], [0, 0, 1, 1], [], []>} : vector<128x12xf32>, vector<12x256xf32>, vector<128x256xf32> -> vector<128x256xf32>
    %c0_4 = arith.constant 0 : index
    %c0_5 = arith.constant 0 : index
    %c0_6 = arith.constant 0 : index
    %4 = vector.load %arg4[%c0_4, %c0_5, %c0_6] : memref<1x128x256xf32, #tpu.memory_space<vmem>>, vector<1x128x256xf32>
    %5 = vector.shape_cast %4 : vector<1x128x256xf32> to vector<128x256xf32>
    %6 = vector.shape_cast %3 : vector<128x256xf32> to vector<1x128x256xf32>
    tpu.vector_store %arg4[%c0_4, %c0_5, %c0_6], %6 {strides = array<i32>} : memref<1x128x256xf32, #tpu.memory_space<vmem>>, vector<1x128x256xf32>,
    return
  }
  func.func @transform_0(%arg0: i32, %arg1: i32) -> (i32, i32, i32) {
    %c0_i32 = arith.constant 0 : i32
    %c0_i32_0 = arith.constant 0 : i32
    return %arg0, %c0_i32, %arg1 : i32, i32, i32
  }
  func.func @transform_1(%arg0: i32, %arg1: i32) -> (i32, i32) {
    %c0_i32 = arith.constant 0 : i32
    %c0_i32_0 = arith.constant 0 : i32
    %c0_i32_1 = arith.constant 0 : i32
    return %c0_i32, %c0_i32_0 : i32, i32
  }
  func.func @transform_2(%arg0: i32, %arg1: i32) -> (i32, i32, i32) {
    %c0_i32 = arith.constant 0 : i32
    %c0_i32_0 = arith.constant 0 : i32
    return %arg0, %c0_i32, %arg1 : i32, i32, i32
  }
}

</mosaic_0001>

<llo_original>
// kernel: heatmap_combiner.1
$region0: #{heatmap_combiner.1}
  #allocation0 [shape = 'u32[]', space=smem, size = 0x4, offset = 0x4, fixed_abs, tag = 'smem constant byte address 0x4 - core index']
  #allocation1 [shape = 'u32[144,128]{1,0:T(1,128)}', space=vmem, size = 0x12000, scoped, tag = 'internal scratch']
  %s0 = inlined_call_operand.vmem [shape: f32[2,12,256], index: 0, kind: input, shape index: {}]
  %s1 = inlined_call_operand.vmem [shape: f32[128,12], index: 1, kind: input, shape index: {}]
  %s2 = inlined_call_operand.vmem [shape: f32[2,128,256], index: 2, kind: output, shape index: {}]
  %s3 = sld [smem:[#allocation0]]
  $region41: #{heatmap_combiner.1} parent=0
    _
  %s5 = ssub.s32 1, %s3
  %s6 = scalar_select 0, %s5, %s3
  loop: start=0, step=1, limit=4
  $region2: #{heatmap_combiner.1} parent=0 // loop_pre_header
    _
  $region3: #{heatmap_combiner.1} parent=0 // loop_header
    %s8 = sphi 0, %s12
    %p9 = scmp.ge.s32.totalorder %s8, 4
    %s15 = sphi 0, %s27
    %s16 = sphi 0, %s23
    %s17 = sphi 0, %s15
    %s18 = sphi 0, %s16
    %s19 = sphi 0, %s17
    %s20 = sphi 0, %s18
    %s32 = sphi 0, %s34
    %s35 = sphi 0, %s32
    %s36 = sphi 0, %s35
    %s52 = sphi 0, %s36
    %s56 = sphi 0, %s56
    %s58 = sphi 0, %s56
    %s59 = sphi 0, %s58
    %s73 = sphi 0, %s59
    %s81 = sphi 0, %s83
    %s84 = sphi 0, %s81
    %s85 = sphi 0, %s84
    %s101 = sphi 0, %s85
  $region4: #{heatmap_combiner.1} parent=0 // loop_header_branch
    %11 = sbr.rel (%p9) target = $region8
  $region5: #{heatmap_combiner.1} parent=0 // loop_body
    %s13 = ssub.s32 %s8, 1
    %s14 = ssub.s32 %s8, 2
    %s21 = sadd.s32 1, %s16
    %p22 = scmp.ge.s32.totalorder %s21, 1
    %s23 = scalar_select %p22, 0, %s21
    %s24 = sadd.s32 1, %s15
    %s25 = scalar_select %p22, %s24, %s15
    %p26 = scmp.ge.s32.totalorder %s25, 2
    %s27 = scalar_select %p26, 0, %s25
    %s28 = ssub.s32 %s15, %s27
    %s29 = ssub.s32 %s16, %s23
    %s30 = sor.u32 %s28, %s29
    %p31 = scmp.eq.s32.totalorder %s30, 0
    %s33 = sadd.s32 %s32, 1
    %s34 = scalar_select %p31, %s32, %s33
    %p37 = pneg %p31
    %p38 = scmp.eq.s32.totalorder %s8, 1
    %p39 = por %p37, %p38
    %p40 = scmp.ne.s32.totalorder %s32, %s35
    %p41 = scmp.eq.s32.totalorder %s8, 0
    %p42 = por %p40, %p41
    %p43 = scmp.ne.s32.totalorder %s32, %s35
    %p44 = scmp.eq.s32.totalorder %s13, 1
    %p45 = por %p43, %p44
    %p46 = scmp.ne.s32.totalorder %s35, %s36
    %p47 = scmp.eq.s32.totalorder %s13, 0
    %p48 = por %p46, %p47
    %p49 = scmp.ne.s32.totalorder %s35, %s36
    %p50 = scmp.eq.s32.totalorder %s14, 1
    %p51 = por %p49, %p50
    %p53 = scmp.ne.s32.totalorder %s36, %s52
    %p54 = scmp.eq.s32.totalorder %s14, 0
    %p55 = por %p53, %p54
    %s57 = sadd.s32 %s56, 1
    %p60 = scmp.eq.s32.totalorder %s8, 1
    %p61 = scmp.ne.s32.totalorder %s56, %s58
    %p62 = scmp.eq.s32.totalorder %s8, 0
    %p63 = por %p61, %p62
    %p64 = scmp.ne.s32.totalorder %s56, %s58
    %p65 = scmp.eq.s32.totalorder %s13, 1
    %p66 = por %p64, %p65
    %p67 = scmp.ne.s32.totalorder %s58, %s59
    %p68 = scmp.eq.s32.totalorder %s13, 0
    %p69 = por %p67, %p68
    %p70 = scmp.ne.s32.totalorder %s58, %s59
    %p71 = scmp.eq.s32.totalorder %s14, 1
    %p72 = por %p70, %p71
    %p74 = scmp.ne.s32.totalorder %s59, %s73
    %p75 = scmp.eq.s32.totalorder %s14, 0
    %p76 = por %p74, %p75
    %s77 = ssub.s32 %s15, %s27
    %s78 = ssub.s32 %s16, %s23
    %s79 = sor.u32 %s77, %s78
    %p80 = scmp.eq.s32.totalorder %s79, 0
    %s82 = sadd.s32 %s81, 1
    %s83 = scalar_select %p80, %s81, %s82
    %p86 = pneg %p80
    %p87 = scmp.eq.s32.totalorder %s8, 1
    %p88 = por %p86, %p87
    %p89 = scmp.ne.s32.totalorder %s81, %s84
    %p90 = scmp.eq.s32.totalorder %s8, 0
    %p91 = por %p89, %p90
    %p92 = scmp.ne.s32.totalorder %s81, %s84
    %p93 = scmp.eq.s32.totalorder %s13, 1
    %p94 = por %p92, %p93
    %p95 = scmp.ne.s32.totalorder %s84, %s85
    %p96 = scmp.eq.s32.totalorder %s13, 0
    %p97 = por %p95, %p96
    %p98 = scmp.ne.s32.totalorder %s84, %s85
    %p99 = scmp.eq.s32.totalorder %s14, 1
    %p100 = por %p98, %p99
    %p102 = scmp.ne.s32.totalorder %s85, %s101
    %p103 = scmp.eq.s32.totalorder %s14, 0
    %p104 = por %p102, %p103
    %p105 = scmp.le.s32.totalorder 1, %s8
    %p106 = scmp.lt.s32.totalorder %s8, 3
    %p107 = pnand %p105, %p106
    %p108 = pneg %p107
    // Predicated region
    $region9: #{heatmap_combiner.1} parent=5 // pred_check
      _
    $region10: #{heatmap_combiner.1} parent=5 // pred_check_branch
      %110 = sbr.rel (%p107) target = $region12
    $region11: #{heatmap_combiner.1} parent=5 // pred_region
      %s111 = ssub.s32 %s8, 1
      // Predicated region
      $region13: #{heatmap_combiner.1} parent=11 // pred_check
        %p112 = pneg %p69
      $region14: #{heatmap_combiner.1} parent=11 // pred_check_branch
        %114 = sbr.rel (%p112) target = $region16
      $region15: #{heatmap_combiner.1} parent=11 // pred_region
        _
      $region16: #{heatmap_combiner.1} parent=11 // pred_fallthru
        _
    $region12: #{heatmap_combiner.1} parent=5 // pred_fallthru
      _
    %p115 = scmp.lt.s32.totalorder %s8, 2
    // Predicated region
    $region17: #{heatmap_combiner.1} parent=5 // pred_check
      %p116 = pneg %p115
    $region18: #{heatmap_combiner.1} parent=5 // pred_check_branch
      %118 = sbr.rel (%p116) target = $region20
    $region19: #{heatmap_combiner.1} parent=5 // pred_region
      // Predicated region
      $region21: #{heatmap_combiner.1} parent=19 // pred_check
        %p119 = pneg %p42
      $region22: #{heatmap_combiner.1} parent=19 // pred_check_branch
        %121 = sbr.rel (%p119) target = $region24
      $region23: #{heatmap_combiner.1} parent=19 // pred_region
        %s122 = smul.u32 2, %s16
        %p123 = scmp.lt.s32.totalorder %s15, 1
        %s124 = scalar_select %p123, %s15, 1
        %p125 = scmp.lt.s32.totalorder %s122, 1
        %s126 = scalar_select %p125, %s122, 1
        %s127 = smul.addr %s124, 4
        %s128 = sadd.s32 %s126, %s127
        %s129 = smul.addr %s128, 8
        %s130 = scalar_lea.vmem %s0, %s129
        %s131 = smul.u32 2, %s16
      $region24: #{heatmap_combiner.1} parent=19 // pred_fallthru
        _
    $region20: #{heatmap_combiner.1} parent=5 // pred_fallthru
      _
    %p132 = scmp.le.s32.totalorder 1, %s8
    %p133 = scmp.lt.s32.totalorder %s8, 3
    %p134 = pnand %p132, %p133
    %p135 = pneg %p134
    // Predicated region
    $region25: #{heatmap_combiner.1} parent=5 // pred_check
      _
    $region26: #{heatmap_combiner.1} parent=5 // pred_check_branch
      %137 = sbr.rel (%p134) target = $region28
    $region27: #{heatmap_combiner.1} parent=5 // pred_region
      %s138 = ssub.s32 %s8, 1
      %s139 = smul.u32 2, %s18
      %p140 = scmp.lt.s32.totalorder %s17, 1
      %s141 = scalar_select %p140, %s17, 1
      %p142 = scmp.lt.s32.totalorder %s139, 1
      %s143 = scalar_select %p142, %s139, 1
      %s144 = smul.addr %s141, 4
      %s145 = sadd.s32 %s143, %s144
      %s146 = smul.addr %s145, 8
      %s147 = scalar_lea.vmem %s0, %s146
      %p148 = pneg %p48
      %p149 = pneg %p45
      %p150 = pneg %p69
      %p151 = pneg %p66
      %p152 = pneg %p97
      %p153 = pneg %p94
      %s154 = smul.u32 2, %s18
      %p155 = scmp.lt.s32.totalorder %s17, 1
      %s156 = scalar_select %p155, %s17, 1
      %p157 = scmp.lt.s32.totalorder %s154, 1
      %s158 = scalar_select %p157, %s154, 1
      %s159 = smul.addr %s156, 32
      %s160 = sadd.s32 %s158, %s159
      %s161 = smul.addr %s160, 8
      %s162 = scalar_lea.vmem %s2, %s161
      %s163 = smul.u32 2, %s18
      %p164 = scmp.lt.s32.totalorder %s17, 1
      %s165 = scalar_select %p164, %s17, 1
      %p166 = scmp.lt.s32.totalorder %s163, 1
      %s167 = scalar_select %p166, %s163, 1
      %s168 = smul.addr %s165, 4
      %s169 = sadd.s32 %s167, %s168
      %s170 = smul.addr %s169, 8
      %s171 = scalar_lea.vmem %s0, %s170
      %s172 = smul.u32 2, %s18
      %s173 = smul.u32 2, %s18
      %p174 = scmp.lt.s32.totalorder %s17, 1
      %s175 = scalar_select %p174, %s17, 1
      %p176 = scmp.lt.s32.totalorder %s173, 1
      %s177 = scalar_select %p176, %s173, 1
      %s178 = smul.addr %s175, 32
      %s179 = sadd.s32 %s177, %s178
      %s180 = smul.addr %s179, 8
      %s181 = scalar_lea.vmem %s2, %s180
      %s182 = smul.u32 2, %s18
      %v183 = vld [vmem:[%s1] sm:$0xff]
      %v184 = vld [vmem:[%s1 + $0x8] sm:$0xff]
      %v185 = vld [vmem:[%s1 + $0x10] sm:$0xff]
      %v186 = vld [vmem:[%s1 + $0x18] sm:$0xff]
      %v187 = vld [vmem:[%s1 + $0x20] sm:$0xff]
      %v188 = vld [vmem:[%s1 + $0x28] sm:$0xff]
      %v189 = vld [vmem:[%s1 + $0x30] sm:$0xff]
      %v190 = vld [vmem:[%s1 + $0x38] sm:$0xff]
      %v191 = vld [vmem:[%s1 + $0x40] sm:$0xff]
      %v192 = vld [vmem:[%s1 + $0x48] sm:$0xff]
      %v193 = vld [vmem:[%s1 + $0x50] sm:$0xff]
      %v194 = vld [vmem:[%s1 + $0x58] sm:$0xff]
      %v195 = vld [vmem:[%s1 + $0x60] sm:$0xff]
      %v196 = vld [vmem:[%s1 + $0x68] sm:$0xff]
      %v197 = vld [vmem:[%s1 + $0x70] sm:$0xff]
      %v198 = vld [vmem:[%s1 + $0x78] sm:$0xff]
      %v199 = vld [vmem:[%s171] sm:$0xff]
      %v200 = vld [vmem:[%s171 + $0x8] sm:$0xff]
      %v201 = vld [vmem:[%s171 + $0x10] sm:$0xf]
      %v202 = vld [vmem:[%s171 + $0x18] sm:$0xf]
      %vm203 = vcmask 97280
      %v205 = vsel %vm203, %v183, 0
      %v208 = vsel %vm203, %v184, 0
      %v211 = vsel %vm203, %v185, 0
      %v214 = vsel %vm203, %v186, 0
      %v217 = vsel %vm203, %v187, 0
      %v220 = vsel %vm203, %v188, 0
      %v223 = vsel %vm203, %v189, 0
      %v226 = vsel %vm203, %v190, 0
      %v229 = vsel %vm203, %v191, 0
      %v232 = vsel %vm203, %v192, 0
      %v235 = vsel %vm203, %v193, 0
      %v238 = vsel %vm203, %v194, 0
      %v241 = vsel %vm203, %v195, 0
      %v244 = vsel %vm203, %v196, 0
      %v247 = vsel %vm203, %v197, 0
      %v250 = vsel %vm203, %v198, 0
      %vm252 = vcmask 1043456
      %v254 = vsel %vm252, %v201, 0
      %v257 = vsel %vm252, %v202, 0
      %259 = vmatprep.subr.mxu0 0.0
      %260 = vmatpush1.msra.mxu0 0.0
      %261 = vmatprep.subr.mxu0 0.0
      %262 = vmatpush1.msra.mxu0 0.0
      %263 = vmatprep.subr.mxu0 0.0
      %264 = vmatpush1.msra.mxu0 0.0
      %265 = vmatprep.subr.mxu0 0.0
      %266 = vmatpush1.msra.mxu0 0.0
      %267 = vmatprep.subr.mxu0 0.0
      %268 = vmatpush1.msra.mxu0 0.0
      %269 = vmatprep.subr.mxu0 0.0
      %270 = vmatpush1.msra.mxu0 0.0
      %271 = vmatprep.subr.mxu0 0.0
      %272 = vmatpush1.msra.mxu0 0.0
      %273 = vmatprep.subr.mxu0 0.0
      %274 = vmatpush1.msra.mxu0 0.0
      %275 = vmatprep.subr.mxu0 0.0
      %276 = vmatpush1.msra.mxu0 0.0
      %277 = vmatprep.subr.mxu0 0.0
      %278 = vmatpush1.msra.mxu0 0.0
      %279 = vmatprep.subr.mxu0 0.0
      %280 = vmatpush1.msra.mxu0 0.0
      %281 = vmatprep.subr.mxu0 0.0
      %282 = vmatpush1.msra.mxu0 0.0
      %283 = vmatprep.subr.mxu0 0.0
      %284 = vmatpush1.msra.mxu0 0.0
      %285 = vmatprep.subr.mxu0 0.0
      %286 = vmatpush1.msra.mxu0 0.0
      %287 = vmatprep.subr.mxu0 %v257
      %288 = vmatpush1.msra.mxu0 %v254
      %289 = vmatprep.subr.mxu0 %v200
      %290 = vmatpush1.msra.mxu0 %v199
      %291 = vmatprep.subr.mxu0 0.0
      %292 = vmatpush2.msra.mxu0 0.0
      %293 = vmatprep.subr.mxu0 0.0
      %294 = vmatpush2.msra.mxu0 0.0
      %295 = vmatprep.subr.mxu0 0.0
      %296 = vmatpush2.msra.mxu0 0.0
      %297 = vmatprep.subr.mxu0 0.0
      %298 = vmatpush2.msra.mxu0 0.0
      %299 = vmatprep.subr.mxu0 0.0
      %300 = vmatpush2.msra.mxu0 0.0
      %301 = vmatprep.subr.mxu0 0.0
      %302 = vmatpush2.msra.mxu0 0.0
      %303 = vmatprep.subr.mxu0 0.0
      %304 = vmatpush2.msra.mxu0 0.0
      %305 = vmatprep.subr.mxu0 0.0
      %306 = vmatpush2.msra.mxu0 0.0
      %307 = vmatprep.subr.mxu0 0.0
      %308 = vmatpush2.msra.mxu0 0.0
      %309 = vmatprep.subr.mxu0 0.0
      %310 = vmatpush2.msra.mxu0 0.0
      %311 = vmatprep.subr.mxu0 0.0
      %312 = vmatpush2.msra.mxu0 0.0
      %313 = vmatprep.subr.mxu0 0.0
      %314 = vmatpush2.msra.mxu0 0.0
      %315 = vmatprep.subr.mxu0 0.0
      %316 = vmatpush2.msra.mxu0 0.0
      %317 = vmatprep.subr.mxu0 0.0
      %318 = vmatpush2.msra.mxu0 0.0
      %319 = vmatprep.subr.mxu0 0.0
      %320 = vmatpush2.msra.mxu0 0.0
      %321 = vmatprep.subr.mxu0 0.0
      %322 = vmatpush2.msra.mxu0 0.0
      %323 = vmatprep.mubr.f32.mxu0 0.0
      %324 = vmatmul.mubr.f32.gmra.mxu0 %v205
      %v325 = vpop.f32.mrf.mxu0
      %v326 = vadd.f32 0.0, %v325
      %v327 = vpop.f32.mrf.mxu0
      %v328 = vadd.f32 0.0, %v327
      %329 = vmatprep.mubr.f32.mxu0 0.0
      %330 = vmatmul.mubr.f32.gmra.mxu0 %v208
      %v331 = vpop.f32.mrf.mxu0
      %v332 = vadd.f32 0.0, %v331
      %v333 = vpop.f32.mrf.mxu0
      %v334 = vadd.f32 0.0, %v333
      %335 = vmatprep.mubr.f32.mxu0 0.0
      %336 = vmatmul.mubr.f32.gmra.mxu0 %v211
      %v337 = vpop.f32.mrf.mxu0
      %v338 = vadd.f32 0.0, %v337
      %v339 = vpop.f32.mrf.mxu0
      %v340 = vadd.f32 0.0, %v339
      %341 = vmatprep.mubr.f32.mxu0 0.0
      %342 = vmatmul.mubr.f32.gmra.mxu0 %v214
      %v343 = vpop.f32.mrf.mxu0
      %v344 = vadd.f32 0.0, %v343
      %v345 = vpop.f32.mrf.mxu0
      %v346 = vadd.f32 0.0, %v345
      %347 = vmatprep.mubr.f32.mxu0 0.0
      %348 = vmatmul.mubr.f32.gmra.mxu0 %v217
      %v349 = vpop.f32.mrf.mxu0
      %v350 = vadd.f32 0.0, %v349
      %v351 = vpop.f32.mrf.mxu0
      %v352 = vadd.f32 0.0, %v351
      %353 = vmatprep.mubr.f32.mxu0 0.0
      %354 = vmatmul.mubr.f32.gmra.mxu0 %v220
      %v355 = vpop.f32.mrf.mxu0
      %v356 = vadd.f32 0.0, %v355
      %v357 = vpop.f32.mrf.mxu0
      %v358 = vadd.f32 0.0, %v357
      %359 = vmatprep.mubr.f32.mxu0 0.0
      %360 = vmatmul.mubr.f32.gmra.mxu0 %v223
      %v361 = vpop.f32.mrf.mxu0
      %v362 = vadd.f32 0.0, %v361
      %v363 = vpop.f32.mrf.mxu0
      %v364 = vadd.f32 0.0, %v363
      %365 = vmatprep.mubr.f32.mxu0 0.0
      %366 = vmatmul.mubr.f32.gmra.mxu0 %v226
      %v367 = vpop.f32.mrf.mxu0
      %v368 = vadd.f32 0.0, %v367
      %v369 = vpop.f32.mrf.mxu0
      %v370 = vadd.f32 0.0, %v369
      %371 = vmatprep.mubr.f32.mxu0 0.0
      %372 = vmatmul.mubr.f32.gmra.mxu0 %v229
      %v373 = vpop.f32.mrf.mxu0
      %v374 = vadd.f32 0.0, %v373
      %v375 = vpop.f32.mrf.mxu0
      %v376 = vadd.f32 0.0, %v375
      %377 = vmatprep.mubr.f32.mxu0 0.0
      %378 = vmatmul.mubr.f32.gmra.mxu0 %v232
      %v379 = vpop.f32.mrf.mxu0
      %v380 = vadd.f32 0.0, %v379
      %v381 = vpop.f32.mrf.mxu0
      %v382 = vadd.f32 0.0, %v381
      %383 = vmatprep.mubr.f32.mxu0 0.0
      %384 = vmatmul.mubr.f32.gmra.mxu0 %v235
      %v385 = vpop.f32.mrf.mxu0
      %v386 = vadd.f32 0.0, %v385
      %v387 = vpop.f32.mrf.mxu0
      %v388 = vadd.f32 0.0, %v387
      %389 = vmatprep.mubr.f32.mxu0 0.0
      %390 = vmatmul.mubr.f32.gmra.mxu0 %v238
      %v391 = vpop.f32.mrf.mxu0
      %v392 = vadd.f32 0.0, %v391
      %v393 = vpop.f32.mrf.mxu0
      %v394 = vadd.f32 0.0, %v393
      %395 = vmatprep.mubr.f32.mxu0 0.0
      %396 = vmatmul.mubr.f32.gmra.mxu0 %v241
      %v397 = vpop.f32.mrf.mxu0
      %v398 = vadd.f32 0.0, %v397
      %v399 = vpop.f32.mrf.mxu0
      %v400 = vadd.f32 0.0, %v399
      %401 = vmatprep.mubr.f32.mxu0 0.0
      %402 = vmatmul.mubr.f32.gmra.mxu0 %v244
      %v403 = vpop.f32.mrf.mxu0
      %v404 = vadd.f32 0.0, %v403
      %v405 = vpop.f32.mrf.mxu0
      %v406 = vadd.f32 0.0, %v405
      %407 = vmatprep.mubr.f32.mxu0 0.0
      %408 = vmatmul.mubr.f32.gmra.mxu0 %v247
      %v409 = vpop.f32.mrf.mxu0
      %v410 = vadd.f32 0.0, %v409
      %v411 = vpop.f32.mrf.mxu0
      %v412 = vadd.f32 0.0, %v411
      %413 = vmatprep.mubr.f32.mxu0 0.0
      %414 = vmatmul.mubr.f32.gmra.mxu0 %v250
      %v415 = vpop.f32.mrf.mxu0
      %v416 = vadd.f32 0.0, %v415
      %v417 = vpop.f32.mrf.mxu0
      %v418 = vadd.f32 0.0, %v417
      %419 = vdwg.mxu0
      %420 = vst [vmem:[%s181] sm:$0xff] %v326
      %421 = vst [vmem:[%s181 + $0x8] sm:$0xff] %v328
      %422 = vst [vmem:[%s181 + $0x10] sm:$0xff] %v332
      %423 = vst [vmem:[%s181 + $0x18] sm:$0xff] %v334
      %424 = vst [vmem:[%s181 + $0x20] sm:$0xff] %v338
      %425 = vst [vmem:[%s181 + $0x28] sm:$0xff] %v340
      %426 = vst [vmem:[%s181 + $0x30] sm:$0xff] %v344
      %427 = vst [vmem:[%s181 + $0x38] sm:$0xff] %v346
      %428 = vst [vmem:[%s181 + $0x40] sm:$0xff] %v350
      %429 = vst [vmem:[%s181 + $0x48] sm:$0xff] %v352
      %430 = vst [vmem:[%s181 + $0x50] sm:$0xff] %v356
      %431 = vst [vmem:[%s181 + $0x58] sm:$0xff] %v358
      %432 = vst [vmem:[%s181 + $0x60] sm:$0xff] %v362
      %433 = vst [vmem:[%s181 + $0x68] sm:$0xff] %v364
      %434 = vst [vmem:[%s181 + $0x70] sm:$0xff] %v368
      %435 = vst [vmem:[%s181 + $0x78] sm:$0xff] %v370
      %436 = vst [vmem:[%s181 + $0x80] sm:$0xff] %v374
      %437 = vst [vmem:[%s181 + $0x88] sm:$0xff] %v376
      %438 = vst [vmem:[%s181 + $0x90] sm:$0xff] %v380
      %439 = vst [vmem:[%s181 + $0x98] sm:$0xff] %v382
      %440 = vst [vmem:[%s181 + $0xa0] sm:$0xff] %v386
      %441 = vst [vmem:[%s181 + $0xa8] sm:$0xff] %v388
      %442 = vst [vmem:[%s181 + $0xb0] sm:$0xff] %v392
      %443 = vst [vmem:[%s181 + $0xb8] sm:$0xff] %v394
      %444 = vst [vmem:[%s181 + $0xc0] sm:$0xff] %v398
      %445 = vst [vmem:[%s181 + $0xc8] sm:$0xff] %v400
      %446 = vst [vmem:[%s181 + $0xd0] sm:$0xff] %v404
      %447 = vst [vmem:[%s181 + $0xd8] sm:$0xff] %v406
      %448 = vst [vmem:[%s181 + $0xe0] sm:$0xff] %v410
      %449 = vst [vmem:[%s181 + $0xe8] sm:$0xff] %v412
      %450 = vst [vmem:[%s181 + $0xf0] sm:$0xff] %v416
      %451 = vst [vmem:[%s181 + $0xf8] sm:$0xff] %v418
      %s452 = smul.u32 2, %s18
      %p453 = scmp.lt.s32.totalorder %s17, 1
      %s454 = scalar_select %p453, %s17, 1
      %p455 = scmp.lt.s32.totalorder %s452, 1
      %s456 = scalar_select %p455, %s452, 1
      %s457 = smul.addr %s454, 32
      %s458 = sadd.s32 %s456, %s457
      %s459 = smul.addr %s458, 8
      %s460 = scalar_lea.vmem %s2, %s459
      // Predicated region
      $region29: #{heatmap_combiner.1} parent=27 // pred_check
        %p461 = pneg %p94
      $region30: #{heatmap_combiner.1} parent=27 // pred_check_branch
        %463 = sbr.rel (%p461) target = $region32
      $region31: #{heatmap_combiner.1} parent=27 // pred_region
        %s464 = smul.u32 2, %s18
      $region32: #{heatmap_combiner.1} parent=27 // pred_fallthru
        _
    $region28: #{heatmap_combiner.1} parent=5 // pred_fallthru
      _
    %p465 = scmp.le.s32.totalorder 2, %s8
    // Predicated region
    $region33: #{heatmap_combiner.1} parent=5 // pred_check
      %p466 = pneg %p465
    $region34: #{heatmap_combiner.1} parent=5 // pred_check_branch
      %468 = sbr.rel (%p466) target = $region36
    $region35: #{heatmap_combiner.1} parent=5 // pred_region
      %s469 = ssub.s32 %s8, 2
      // Predicated region
      $region37: #{heatmap_combiner.1} parent=35 // pred_check
        %p470 = pneg %p100
      $region38: #{heatmap_combiner.1} parent=35 // pred_check_branch
        %472 = sbr.rel (%p470) target = $region40
      $region39: #{heatmap_combiner.1} parent=35 // pred_region
        %s473 = smul.u32 2, %s20
        %p474 = scmp.lt.s32.totalorder %s19, 1
        %s475 = scalar_select %p474, %s19, 1
        %p476 = scmp.lt.s32.totalorder %s473, 1
        %s477 = scalar_select %p476, %s473, 1
        %s478 = smul.addr %s475, 32
        %s479 = sadd.s32 %s477, %s478
        %s480 = smul.addr %s479, 8
        %s481 = scalar_lea.vmem %s2, %s480
      $region40: #{heatmap_combiner.1} parent=35 // pred_fallthru
        _
    $region36: #{heatmap_combiner.1} parent=5 // pred_fallthru
      _
  $region6: #{heatmap_combiner.1} parent=0 // loop_footer
    %s12 = sadd.s32 1, %s8
  $region7: #{heatmap_combiner.1} parent=0 // loop_footer_branch
    %7 = sbr.rel target = $region3
  $region8: #{heatmap_combiner.1} parent=0 // loop_exit
    _

</llo_original>
